<compile_context>
chip_gen: v6e
topology: v6e:2x2x1
jax: 0.10.0
libtpu: 0.0.40
codegen_flags: <defaults>
</compile_context>

<pallas_src>
import jax
import jax.numpy as jnp
from jax.experimental import pallas as pl
from jax.experimental.pallas import tpu as pltpu


_LANE = 128


def _round_up(x, m):
    return ((x + m - 1) // m) * m


def _cdiv(a, b):
    return (a + b - 1) // b


def _vmem_capacity_bytes():
    """Physical VMEM per TensorCore (generation-aware, safe fallback)."""
    try:
        return int(pltpu.get_tpu_info().vmem_capacity_bytes)
    except Exception:
        return 64 * 1024 * 1024   # conservative (v7x per-TC VMEM)


# -----------------------------------------------------------------------------
# Kernels
# -----------------------------------------------------------------------------
def _linear_relu_kernel(x_ref, w_ref, b_ref, o_ref):
    """Single-step: o = relu(x @ w + b). `w` is pre-transposed to [K, N]."""
    acc = jnp.dot(x_ref[...], w_ref[...], preferred_element_type=jnp.float32)
    acc = acc + b_ref[...].astype(jnp.float32)
    o_ref[...] = jnp.maximum(acc, 0.0).astype(o_ref.dtype)


def _linear_relu_kacc_f32_kernel(x_ref, w_ref, b_ref, o_ref):
    """K-tiled, f32 output: accumulate straight into the (K-resident) output
    block; bias + relu on the last K step. No extra VMEM scratch."""
    k = pl.program_id(2)

    @pl.when(k == 0)
    def _init():
        o_ref[...] = jnp.zeros_like(o_ref)

    o_ref[...] += jnp.dot(x_ref[...], w_ref[...],
                          preferred_element_type=jnp.float32)

    @pl.when(k == pl.num_programs(2) - 1)
    def _finalize():
        o_ref[...] = jnp.maximum(
            o_ref[...] + b_ref[...].astype(jnp.float32), 0.0)


def _linear_relu_kacc_scratch_kernel(x_ref, w_ref, b_ref, o_ref, acc_ref):
    """K-tiled, low-precision output: f32 scratch accumulator."""
    k = pl.program_id(2)

    @pl.when(k == 0)
    def _init():
        acc_ref[...] = jnp.zeros_like(acc_ref)

    acc_ref[...] += jnp.dot(x_ref[...], w_ref[...],
                            preferred_element_type=jnp.float32)

    @pl.when(k == pl.num_programs(2) - 1)
    def _finalize():
        out = acc_ref[...] + b_ref[...].astype(jnp.float32)
        o_ref[...] = jnp.maximum(out, 0.0).astype(o_ref.dtype)


# -----------------------------------------------------------------------------
# Wrapper
# -----------------------------------------------------------------------------
def encoder_forward(x, weight, bias, *,
                    compute_dtype=jnp.bfloat16,
                    tm_max=512, tn_max=512, tk_max=2048,
                    allow_resident_weight=True):
    """relu(x @ weight.T + bias) with PyTorch nn.Linear semantics.

    x:      [..., in_features]
    weight: [out_features, in_features]   (native PyTorch layout)
    bias:   [out_features]

    compute_dtype: matmul operand dtype. bf16 (default) uses the MXU at its
    native rate with f32 accumulation; pass jnp.float32 for exact results.
    """
    n_out, k_in = weight.shape
    lead_shape = x.shape[:-1]
    m = 1
    for d in lead_shape:
        m *= d

    out_dtype = x.dtype
    out_is_f32 = jnp.dtype(out_dtype) == jnp.dtype(jnp.float32)
    compute_dtype = jnp.dtype(compute_dtype)
    c_bytes = compute_dtype.itemsize
    o_bytes = jnp.dtype(out_dtype).itemsize

    # Sublane alignment of the M axis (bf16 packs 16 rows per vreg).
    m_align = 16 if (c_bytes < 4 or o_bytes < 4) else 8

    kp = _round_up(k_in, _LANE)
    np_ = _round_up(n_out, _LANE)
    mp0 = _round_up(max(m, 1), m_align)

    vmem_cap = _vmem_capacity_bytes()
    # Working-set budget: half the physical VMEM (32 MiB on v7x, 64 MiB on
    # v5e/v6e), leaving headroom for Mosaic-internal scratch.
    budget = min(vmem_cap // 2, 64 * 1024 * 1024)

    # One-time layout change: weight -> [K, N] so the MXU is fed directly (no
    # per-tile XLU transpose); cast operands to the compute dtype (f32
    # accumulation is preserved via preferred_element_type). Under jit with
    # fixed weights the transpose / cast / pad is constant-folded.
    x2d = x.reshape(m, k_in).astype(compute_dtype)
    wt = weight.T.astype(compute_dtype)            # [k_in, n_out]
    b2d = bias.astype(jnp.float32).reshape(1, n_out)

    w_res_bytes = kp * np_ * c_bytes
    b_res_bytes = np_ * 4

    def _pick_tm(cap):
        tm_ = min(cap, mp0)
        return max(m_align, (tm_ // m_align) * m_align)

    def _res_fp(tm_):
        # Count everything twice (Pallas double-buffers pipelined operands).
        return 2 * (w_res_bytes + b_res_bytes
                    + tm_ * kp * c_bytes + tm_ * np_ * o_bytes)

    # ------------------------------------------------ resident-weight path --
    use_resident = False
    tm = _pick_tm(tm_max)
    if allow_resident_weight:
        while _res_fp(tm) > budget and tm > m_align:
            tm = max(m_align, (tm // 2 // m_align) * m_align)
        use_resident = _res_fp(tm) <= budget

    if use_resident:
        # Give both TensorCores (v7x) work: >= 2 parallel tiles when M allows.
        if _cdiv(mp0, tm) < 2 and mp0 >= 2 * m_align:
            tm = max(m_align, _round_up(_cdiv(mp0, 2), m_align))
        mp = _round_up(m, tm)
        grid_m = mp // tm

        if (mp, kp) != (m, k_in):
            x2d = jnp.pad(x2d, ((0, mp - m), (0, kp - k_in)))
        wt_p = wt
        if (kp, np_) != (k_in, n_out):
            wt_p = jnp.pad(wt, ((0, kp - k_in), (0, np_ - n_out)))
        if np_ != n_out:
            b2d = jnp.pad(b2d, ((0, 0), (0, np_ - n_out)))

        footprint = _res_fp(tm)
        vmem_limit = int(min(vmem_cap - 4 * 1024 * 1024,
                             max(32 * 1024 * 1024,
                                 footprint + 4 * 1024 * 1024)))

        # Truthful HBM traffic: weight/bias read exactly once.
        cost = pl.CostEstimate(
            flops=2 * m * k_in * n_out,
            transcendentals=0,
            bytes_accessed=int(mp * kp * c_bytes + kp * np_ * c_bytes
                               + np_ * 4 + mp * np_ * o_bytes))

        out2d = pl.pallas_call(
            _linear_relu_kernel,
            out_shape=jax.ShapeDtypeStruct((mp, np_), out_dtype),
            grid=(grid_m,),
            in_specs=[
                # Activations stream over M.
                pl.BlockSpec((tm, kp), lambda i: (i, 0)),
                # Constant block index => weight / bias DMA'd exactly once
                # and stay resident in VMEM for the whole grid.
                pl.BlockSpec((kp, np_), lambda i: (0, 0)),
                pl.BlockSpec((1, np_), lambda i: (0, 0)),
            ],
            out_specs=pl.BlockSpec((tm, np_), lambda i: (i, 0)),
            compiler_params=pltpu.CompilerParams(
                dimension_semantics=("parallel",),
                vmem_limit_bytes=vmem_limit),
            cost_estimate=cost,
        )(x2d, wt_p, b2d)

        out2d = out2d[:m, :n_out]
        return out2d.reshape(*lead_shape, n_out)

    # ---------------------------------------------- general tiled (M, N, K) --
    def _choose_tiles(tm_cap, tn_cap, tk_cap):
        tm_ = _pick_tm(tm_cap)
        tn_ = max(_LANE, (min(tn_cap, np_) // _LANE) * _LANE)
        while np_ % tn_:
            tn_ -= _LANE
        tk_ = max(_LANE, (min(tk_cap, kp) // _LANE) * _LANE)
        while kp % tk_:
            tk_ -= _LANE
        return tm_, tn_, tk_

    def _tiled_fp(tm_, tn_, tk_):
        fp = 2 * (tm_ * tk_ * c_bytes + tk_ * tn_ * c_bytes
                  + tn_ * 4 + tm_ * tn_ * o_bytes)
        if not out_is_f32:
            fp += tm_ * tn_ * 4        # f32 accumulator scratch
        return fp

    tm, tn, tk = _choose_tiles(tm_max, tn_max, tk_max)
    if _tiled_fp(tm, tn, tk) > budget:
        tm, tn, tk = _choose_tiles(min(tm_max, 256), min(tn_max, 256),
                                   min(tk_max, 512))
    mp = _round_up(m, tm)

    # Keep both TensorCores busy on v7x if the parallel grid would be 1x1.
    if (mp // tm) * (np_ // tn) < 2 and mp0 >= 2 * m_align:
        tm = max(m_align, _round_up(_cdiv(mp0, 2), m_align))
        mp = _round_up(m, tm)

    grid_m, grid_n, grid_k = mp // tm, np_ // tn, kp // tk

    if (mp, kp) != (m, k_in):
        x2d = jnp.pad(x2d, ((0, mp - m), (0, kp - k_in)))
    wt_p = wt
    if (kp, np_) != (k_in, n_out):
        wt_p = jnp.pad(wt, ((0, kp - k_in), (0, np_ - n_out)))
    if np_ != n_out:
        b2d = jnp.pad(b2d, ((0, 0), (0, np_ - n_out)))

    footprint = _tiled_fp(tm, tn, tk)
    vmem_limit = int(min(vmem_cap - 4 * 1024 * 1024,
                         max(32 * 1024 * 1024, footprint + 4 * 1024 * 1024)))

    # Truthful HBM traffic for this schedule: x re-read per N tile, weight
    # re-read per M tile (bias negligible), output written once.
    cost = pl.CostEstimate(
        flops=2 * m * k_in * n_out,
        transcendentals=0,
        bytes_accessed=int(mp * kp * c_bytes * grid_n
                           + kp * np_ * c_bytes * grid_m
                           + np_ * 4 * grid_m
                           + mp * np_ * o_bytes))

    if grid_k == 1:
        # Full K fits one tile: drop the reduction axis entirely.
        out2d = pl.pallas_call(
            _linear_relu_kernel,
            out_shape=jax.ShapeDtypeStruct((mp, np_), out_dtype),
            grid=(grid_m, grid_n),
            in_specs=[
                pl.BlockSpec((tm, kp), lambda i, j: (i, 0)),
                pl.BlockSpec((kp, tn), lambda i, j: (0, j)),
                pl.BlockSpec((1, tn), lambda i, j: (0, j)),
            ],
            out_specs=pl.BlockSpec((tm, tn), lambda i, j: (i, j)),
            compiler_params=pltpu.CompilerParams(
                dimension_semantics=("parallel", "parallel"),
                vmem_limit_bytes=vmem_limit),
            cost_estimate=cost,
        )(x2d, wt_p, b2d)
    else:
        kernel = (_linear_relu_kacc_f32_kernel if out_is_f32
                  else _linear_relu_kacc_scratch_kernel)
        scratch = [] if out_is_f32 else [pltpu.VMEM((tm, tn), jnp.float32)]
        out2d = pl.pallas_call(
            kernel,
            out_shape=jax.ShapeDtypeStruct((mp, np_), out_dtype),
            grid=(grid_m, grid_n, grid_k),
            in_specs=[
                pl.BlockSpec((tm, tk), lambda i, j, k: (i, k)),
                pl.BlockSpec((tk, tn), lambda i, j, k: (k, j)),
                pl.BlockSpec((1, tn), lambda i, j, k: (0, j)),
            ],
            out_specs=pl.BlockSpec((tm, tn), lambda i, j, k: (i, j)),
            scratch_shapes=scratch,
            compiler_params=pltpu.CompilerParams(
                dimension_semantics=("parallel", "parallel", "arbitrary"),
                vmem_limit_bytes=vmem_limit),
            cost_estimate=cost,
        )(x2d, wt_p, b2d)

    out2d = out2d[:m, :n_out]
    return out2d.reshape(*lead_shape, n_out)


# -----------------------------------------------------------------------------
# Reference + tests
# -----------------------------------------------------------------------------
def _ref_forward(x, weight, bias):
    y = jnp.einsum("...k,nk->...n", x.astype(jnp.float32),
                   weight.astype(jnp.float32),
                   preferred_element_type=jnp.float32)
    y = y + bias.astype(jnp.float32)
    return jnp.maximum(y, 0.0).astype(x.dtype)


if __name__ == "__main__":
    key = jax.random.PRNGKey(0)

    # --- Test 1: toy module shapes (in=32, out=32, x=[2,8,32]), bf16 MXU path,
    #             resident-weight schedule ------------------------------------
    in1, out1 = 32, 32
    kx, kw, kb, key = jax.random.split(key, 4)
    bound1 = 1.0 / (in1 ** 0.5)
    x1 = jax.random.normal(kx, (2, 8, in1), dtype=jnp.float32)
    w1 = jax.random.uniform(kw, (out1, in1), minval=-bound1, maxval=bound1,
                            dtype=jnp.float32)
    b1 = jax.random.uniform(kb, (out1,), minval=-bound1, maxval=bound1,
                            dtype=jnp.float32)
    got1 = jax.block_until_ready(encoder_forward(x1, w1, b1))
    ref1 = _ref_forward(x1, w1, b1)
    assert got1.shape == (2, 8, out1)
    assert jnp.allclose(got1, ref1, atol=2e-2, rtol=2e-2)

    # --- Test 1b: pure-f32 compute path (tight tolerance) ---------------------
    got1f = jax.block_until_ready(
        encoder_forward(x1, w1, b1, compute_dtype=jnp.float32))
    assert jnp.allclose(got1f, ref1, atol=1e-5, rtol=1e-5)

    # --- Test 2: larger layer, resident weight + split M (2 parallel tiles) ---
    in2, out2 = 1024, 384
    kx, kw, kb, key = jax.random.split(key, 4)
    bound2 = 1.0 / (in2 ** 0.5)
    x2 = jax.random.normal(kx, (2, 64, in2), dtype=jnp.float32)
    w2 = jax.random.uniform(kw, (out2, in2), minval=-bound2, maxval=bound2,
                            dtype=jnp.float32)
    b2 = jax.random.uniform(kb, (out2,), minval=-bound2, maxval=bound2,
                            dtype=jnp.float32)
    got2 = jax.block_until_ready(encoder_forward(x2, w2, b2))
    ref2 = _ref_forward(x2, w2, b2)
    assert got2.shape == (2, 64, out2)
    assert jnp.allclose(got2, ref2, atol=2e-2, rtol=2e-2)

    # --- Test 3: force tiled (M,N,K) schedule, f32-output accumulates into
    #             o_ref (no scratch) -------------------------------------------
    got3 = jax.block_until_ready(
        encoder_forward(x2, w2, b2, allow_resident_weight=False, tk_max=512))
    assert jnp.allclose(got3, ref2, atol=2e-2, rtol=2e-2)

    got3f = jax.block_until_ready(
        encoder_forward(x2, w2, b2, compute_dtype=jnp.float32,
                        allow_resident_weight=False, tk_max=512))
    assert jnp.allclose(got3f, ref2, atol=1e-4, rtol=1e-4)

    # --- Test 4: bf16 activations/output -> f32-scratch K-accumulator path ----
    in4, out4 = 256, 160
    kx, kw, kb, key = jax.random.split(key, 4)
    bound4 = 1.0 / (in4 ** 0.5)
    x4 = jax.random.normal(kx, (2, 32, in4),
                           dtype=jnp.float32).astype(jnp.bfloat16)
    w4 = jax.random.uniform(kw, (out4, in4), minval=-bound4, maxval=bound4,
                            dtype=jnp.float32)
    b4 = jax.random.uniform(kb, (out4,), minval=-bound4, maxval=bound4,
                            dtype=jnp.float32)
    got4 = jax.block_until_ready(
        encoder_forward(x4, w4, b4, allow_resident_weight=False, tk_max=128))
    ref4 = _ref_forward(x4, w4, b4)
    assert got4.shape == (2, 32, out4)
    assert got4.dtype == jnp.bfloat16
    assert jnp.allclose(got4.astype(jnp.float32), ref4.astype(jnp.float32),
                        atol=5e-2, rtol=5e-2)

    print("KERNEL_OK")
</pallas_src>

<mosaic_0001>
module attributes {stable_mosaic.version = 11 : i64} {
  func.func @_linear_relu_kernel(%arg0: i32, %arg1: memref<16x128xbf16, #tpu.memory_space<vmem>>, %arg2: memref<128x128xbf16, #tpu.memory_space<vmem>>, %arg3: memref<1x128xf32, #tpu.memory_space<vmem>>, %arg4: memref<16x128xf32, #tpu.memory_space<vmem>>) attributes {dimension_semantics = [#tpu.dimension_semantics<parallel>], iteration_bounds = array<i64: 1>, scalar_prefetch = 0 : i64, scratch_operands = 0 : i64, tpu.core_type = #tpu.core_type<tc>, window_params = [{transform_indices = @transform_0, window_bounds = array<i64: 16, 128>}, {pipeline_mode = #tpu.pipeline_mode<synchronous>, transform_indices = @transform_1, window_bounds = array<i64: 128, 128>}, {pipeline_mode = #tpu.pipeline_mode<synchronous>, transform_indices = @transform_2, window_bounds = array<i64: 1, 128>}, {transform_indices = @transform_3, window_bounds = array<i64: 16, 128>}]} {
    %c0 = arith.constant 0 : index
    %c0_0 = arith.constant 0 : index
    %0 = vector.load %arg1[%c0, %c0_0] : memref<16x128xbf16, #tpu.memory_space<vmem>>, vector<16x128xbf16>
    %c0_1 = arith.constant 0 : index
    %c0_2 = arith.constant 0 : index
    %1 = vector.load %arg2[%c0_1, %c0_2] : memref<128x128xbf16, #tpu.memory_space<vmem>>, vector<128x128xbf16>
    %cst = arith.constant dense<0.000000e+00> : vector<16x128xf32>
    %2 = tpu.matmul %0, %1, %cst {dimension_numbers = #tpu.dot_dimension_numbers<[1], [0], [0], [1], [0, 0, 1, 1], [], []>} : vector<16x128xbf16>, vector<128x128xbf16>, vector<16x128xf32> -> vector<16x128xf32>
    %c0_3 = arith.constant 0 : index
    %c0_4 = arith.constant 0 : index
    %3 = vector.load %arg3[%c0_3, %c0_4] : memref<1x128xf32, #tpu.memory_space<vmem>>, vector<1x128xf32>
    %4 = vector.broadcast %3 : vector<1x128xf32> to vector<16x128xf32>
    %5 = arith.addf %2, %4 : vector<16x128xf32>
    %cst_5 = arith.constant 0.000000e+00 : f32
    %6 = vector.broadcast %cst_5 : f32 to vector<16x128xf32>
    %7 = arith.maximumf %5, %6 : vector<16x128xf32>
    %c0_6 = arith.constant 0 : index
    %c0_7 = arith.constant 0 : index
    %8 = vector.load %arg4[%c0_6, %c0_7] : memref<16x128xf32, #tpu.memory_space<vmem>>, vector<16x128xf32>
    tpu.vector_store %arg4[%c0_6, %c0_7], %7 {strides = array<i32>} : memref<16x128xf32, #tpu.memory_space<vmem>>, vector<16x128xf32>,
    return
  }
  func.func @transform_0(%arg0: i32) -> (i32, i32) {
    %c0_i32 = arith.constant 0 : i32
    %c0_i32_0 = arith.constant 0 : i32
    return %arg0, %c0_i32 : i32, i32
  }
  func.func @transform_1(%arg0: i32) -> (i32, i32) {
    %c0_i32 = arith.constant 0 : i32
    %c0_i32_0 = arith.constant 0 : i32
    %c0_i32_1 = arith.constant 0 : i32
    return %c0_i32, %c0_i32_0 : i32, i32
  }
  func.func @transform_2(%arg0: i32) -> (i32, i32) {
    %c0_i32 = arith.constant 0 : i32
    %c0_i32_0 = arith.constant 0 : i32
    %c0_i32_1 = arith.constant 0 : i32
    return %c0_i32, %c0_i32_0 : i32, i32
  }
  func.func @transform_3(%arg0: i32) -> (i32, i32) {
    %c0_i32 = arith.constant 0 : i32
    %c0_i32_0 = arith.constant 0 : i32
    return %arg0, %c0_i32 : i32, i32
  }
}

</mosaic_0001>

<llo_original>
// kernel: tpu_custom_call.1
$region0: #{tpu_custom_call.1}
  #allocation0 [shape = 'u32[]', space=smem, size = 0x4, offset = 0x4, fixed_abs, tag = 'smem constant byte address 0x4 - core index']
  #allocation1 [shape = 'u32[144,128]{1,0:T(1,128)}', space=vmem, size = 0x12000, scoped, tag = 'internal scratch']
  %s0 = inlined_call_operand.hbm [shape: bf16[16,128], index: 0, kind: input, shape index: {}]
  %s1 = inlined_call_operand.hbm [shape: bf16[128,128], index: 1, kind: input, shape index: {}]
  %s2 = inlined_call_operand.vmem [shape: f32[1,128], index: 2, kind: input, shape index: {}]
  %s3 = inlined_call_operand.hbm [shape: f32[16,128], index: 3, kind: output, shape index: {}]
  %s4 = sld [smem:[#allocation0]]
  $region30: #{tpu_custom_call.1} parent=0
    _
  %s6 = ssub.s32 1, %s4
  %s7 = scalar_select 0, %s6, %s4
  $region1: #{tpu_custom_call.1} parent=0
    #allocation2 [shape = 'u8[4096]{0}', space=vmem, size = 0x1000, scoped, tag = 'input window, operand 0, single buffered']
    #allocation3 [shape = 's32[1]{0}', space=sflag, size = 0x4, scoped, tag = 'scoped memory for tpu_custom_call.1']
    #allocation4 [shape = 's32[1]{0}', space=sflag, size = 0x4, scoped, tag = 'scoped memory for tpu_custom_call.1']
    #allocation5 [shape = 'u8[32768]{0}', space=vmem, size = 0x8000, scoped, tag = 'input window, operand 1, single buffered']
    #allocation6 [shape = 's32[1]{0}', space=sflag, size = 0x4, scoped, tag = 'scoped memory for tpu_custom_call.1']
    #allocation7 [shape = 'u8[8192]{0}', space=vmem, size = 0x2000, scoped, tag = 'output window, operand 0, single buffered']
    %8 = vsyncpa [#allocation3], 0
    %9 = vsyncpa [#allocation6], 0
    %10 = vsyncpa [#allocation4], 0
    // Predicated region
    $region2: #{tpu_custom_call.1} parent=1 // pred_check
      _
    $region3: #{tpu_custom_call.1} parent=1 // pred_check_branch
      %12 = sbr.rel (0) target = $region5
    $region4: #{tpu_custom_call.1} parent=1 // pred_region
      %s14 = ssub.s32 128, 128
      %15 = vsyncadd [#allocation3], %s14
      %s16 = sshll.u32 [#allocation2], 4
      %s17 = int_to_ptr.vmem [resolvable:$true] %s16
      %22 = dma.hbm_to_vmem [thread:$0]  %s0, 128, %s17, [#allocation3], 64, 64, 4
    $region5: #{tpu_custom_call.1} parent=1 // pred_fallthru
      _
    // Predicated region
    $region6: #{tpu_custom_call.1} parent=1 // pred_check
      _
    $region7: #{tpu_custom_call.1} parent=1 // pred_check_branch
      %24 = sbr.rel (0) target = $region9
    $region8: #{tpu_custom_call.1} parent=1 // pred_region
      %s26 = ssub.s32 1024, 1024
      %27 = vsyncadd [#allocation6], %s26
      %s28 = sshll.u32 [#allocation5], 4
      %s29 = int_to_ptr.vmem [resolvable:$true] %s28
      %34 = dma.hbm_to_vmem [thread:$0]  %s1, 1024, %s29, [#allocation6], 64, 64, 4
    $region9: #{tpu_custom_call.1} parent=1 // pred_fallthru
      _
    // Predicated region
    $region10: #{tpu_custom_call.1} parent=1 // pred_check
      _
    $region11: #{tpu_custom_call.1} parent=1 // pred_check_branch
      %36 = sbr.rel (0) target = $region13
    $region12: #{tpu_custom_call.1} parent=1 // pred_region
      _
    $region13: #{tpu_custom_call.1} parent=1 // pred_fallthru
      _
    // Predicated region
    $region14: #{tpu_custom_call.1} parent=1 // pred_check
      _
    $region15: #{tpu_custom_call.1} parent=1 // pred_check_branch
      %38 = sbr.rel (0) target = $region17
    $region16: #{tpu_custom_call.1} parent=1 // pred_region
      %39 = dma.done [#allocation3], 128
    $region17: #{tpu_custom_call.1} parent=1 // pred_fallthru
      _
    // Predicated region
    $region18: #{tpu_custom_call.1} parent=1 // pred_check
      _
    $region19: #{tpu_custom_call.1} parent=1 // pred_check_branch
      %41 = sbr.rel (0) target = $region21
    $region20: #{tpu_custom_call.1} parent=1 // pred_region
      %42 = dma.done [#allocation6], 1024
    $region21: #{tpu_custom_call.1} parent=1 // pred_fallthru
      _
    %v44 = vld [vmem:[#allocation2] sm:$0xf]
    %v45 = vld [vmem:[#allocation2 + $0x4] sm:$0xf]
    %v46 = vld [vmem:[#allocation5] sm:$0xf]
    %v47 = vld [vmem:[#allocation5 + $0x4] sm:$0xf]
    %v48 = vld [vmem:[#allocation5 + $0x8] sm:$0xf]
    %v49 = vld [vmem:[#allocation5 + $0xc] sm:$0xf]
    %v50 = vld [vmem:[#allocation5 + $0x10] sm:$0xf]
    %v51 = vld [vmem:[#allocation5 + $0x14] sm:$0xf]
    %v52 = vld [vmem:[#allocation5 + $0x18] sm:$0xf]
    %v53 = vld [vmem:[#allocation5 + $0x1c] sm:$0xf]
    %v54 = vld [vmem:[#allocation5 + $0x20] sm:$0xf]
    %v55 = vld [vmem:[#allocation5 + $0x24] sm:$0xf]
    %v56 = vld [vmem:[#allocation5 + $0x28] sm:$0xf]
    %v57 = vld [vmem:[#allocation5 + $0x2c] sm:$0xf]
    %v58 = vld [vmem:[#allocation5 + $0x30] sm:$0xf]
    %v59 = vld [vmem:[#allocation5 + $0x34] sm:$0xf]
    %v60 = vld [vmem:[#allocation5 + $0x38] sm:$0xf]
    %v61 = vld [vmem:[#allocation5 + $0x3c] sm:$0xf]
    %v62 = vld [vmem:[%s2] sm:$0x1]
    %v64 = vlaneseq
    %v65 = vshrl.u32 %v64, 7
    %v66 = vsub.s32 0, %v65
    %v67 = vrot.slane %v62, %v66
    %v71 = vunpack.c.l.b16 %v44
    %v72 = vunpack.c.l.b16 %v45
    %v73 = vpack.c.b16 %v72, %v71
    %v91 = vunpack.c.l.b16 %v46
    %v92 = vunpack.c.l.b16 %v47
    %v93 = vunpack.c.l.b16 %v48
    %v94 = vunpack.c.l.b16 %v49
    %v95 = vunpack.c.l.b16 %v50
    %v96 = vunpack.c.l.b16 %v51
    %v97 = vunpack.c.l.b16 %v52
    %v98 = vunpack.c.l.b16 %v53
    %v99 = vunpack.c.l.b16 %v54
    %v100 = vunpack.c.l.b16 %v55
    %v101 = vunpack.c.l.b16 %v56
    %v102 = vunpack.c.l.b16 %v57
    %v103 = vunpack.c.l.b16 %v58
    %v104 = vunpack.c.l.b16 %v59
    %v105 = vunpack.c.l.b16 %v60
    %v106 = vunpack.c.l.b16 %v61
    %v107 = vpack.c.b16 %v92, %v91
    %v108 = vpack.c.b16 %v94, %v93
    %v109 = vpack.c.b16 %v96, %v95
    %v110 = vpack.c.b16 %v98, %v97
    %v111 = vpack.c.b16 %v100, %v99
    %v112 = vpack.c.b16 %v102, %v101
    %v113 = vpack.c.b16 %v104, %v103
    %v114 = vpack.c.b16 %v106, %v105
    %123 = vmatprep.subr.bf16.mxu0 0
    %124 = vmatpush1.bf16.msra.mxu0 %v114
    %125 = vmatprep.subr.bf16.mxu0 0
    %126 = vmatpush1.bf16.msra.mxu0 %v113
    %127 = vmatprep.subr.bf16.mxu0 0
    %128 = vmatpush1.bf16.msra.mxu0 %v112
    %129 = vmatprep.subr.bf16.mxu0 0
    %130 = vmatpush1.bf16.msra.mxu0 %v111
    %131 = vmatprep.subr.bf16.mxu0 0
    %132 = vmatpush1.bf16.msra.mxu0 %v110
    %133 = vmatprep.subr.bf16.mxu0 0
    %134 = vmatpush1.bf16.msra.mxu0 %v109
    %135 = vmatprep.subr.bf16.mxu0 0
    %136 = vmatpush1.bf16.msra.mxu0 %v108
    %137 = vmatprep.subr.bf16.mxu0 0
    %138 = vmatpush1.bf16.msra.mxu0 %v107
    %139 = vmatprep.subr.bf16.mxu0 0
    %140 = vmatpush2.bf16.msra.mxu0 0
    %141 = vmatprep.subr.bf16.mxu0 0
    %142 = vmatpush2.bf16.msra.mxu0 0
    %143 = vmatprep.subr.bf16.mxu0 0
    %144 = vmatpush2.bf16.msra.mxu0 0
    %145 = vmatprep.subr.bf16.mxu0 0
    %146 = vmatpush2.bf16.msra.mxu0 0
    %147 = vmatprep.subr.bf16.mxu0 0
    %148 = vmatpush2.bf16.msra.mxu0 0
    %149 = vmatprep.subr.bf16.mxu0 0
    %150 = vmatpush2.bf16.msra.mxu0 0
    %151 = vmatprep.subr.bf16.mxu0 0
    %152 = vmatpush2.bf16.msra.mxu0 0
    %153 = vmatprep.subr.bf16.mxu0 0
    %154 = vmatpush2.bf16.msra.mxu0 0
    %155 = vmatprep.mubr.bf16.mxu0 0
    %156 = vmatmul.mubr.bf16.gmra.mxu0 %v73
    %v157 = vpop.f32.mrf.mxu0
    %v158 = vadd.f32 %v67, %v157
    %v159 = vpop.f32.mrf.mxu0
    %v160 = vpop.f32.mrf.mxu0
    %v161 = vadd.f32 %v67, %v160
    %v162 = vpop.f32.mrf.mxu0
    %163 = vdwg.mxu0
    %v164 = vmax.f32 %v158, 0.0
    %v165 = vmax.f32 %v161, 0.0
    %166 = vst [vmem:[#allocation7] sm:$0xff] %v164
    %167 = vst [vmem:[#allocation7 + $0x8] sm:$0xff] %v165
    // Predicated region
    $region22: #{tpu_custom_call.1} parent=1 // pred_check
      _
    $region23: #{tpu_custom_call.1} parent=1 // pred_check_branch
      %169 = sbr.rel (0) target = $region25
    $region24: #{tpu_custom_call.1} parent=1 // pred_region
      %s171 = ssub.s32 256, 256
      %172 = vsyncadd [#allocation4], %s171
      %s173 = sshll.u32 [#allocation7], 4
      %s174 = int_to_ptr.vmem [resolvable:$true] %s173
      %179 = dma.vmem_to_hbm [thread:$0]  %s174, 256, %s3, [#allocation4], 128, 128, 8
    $region25: #{tpu_custom_call.1} parent=1 // pred_fallthru
      _
    // Predicated region
    $region26: #{tpu_custom_call.1} parent=1 // pred_check
      _
    $region27: #{tpu_custom_call.1} parent=1 // pred_check_branch
      %181 = sbr.rel (0) target = $region29
    $region28: #{tpu_custom_call.1} parent=1 // pred_region
      %182 = dma.done [#allocation4], 256
    $region29: #{tpu_custom_call.1} parent=1 // pred_fallthru
      _
    %183 = vsyncpa [#allocation3], 1
    %184 = vsyncpa [#allocation6], 1
    %185 = vsyncpa [#allocation4], 1

</llo_original>
